<compile_context>
chip_gen: v5e
topology: v5e:2x2
jax: 0.10.0
libtpu: 0.0.40
codegen_flags: <defaults>
</compile_context>

<pallas_src>
import jax
import jax.numpy as jnp
from jax.experimental import pallas as pl
from jax.experimental.pallas import tpu as pltpu


def _round_up(x, m):
    return ((x + m - 1) // m) * m


def _make_kernel(n_total, tn, needs_mask):
    inv_n = 1.0 / float(n_total)

    def kernel(y1_ref, y2_ref, y3_ref, lbl_ref, out_ref):
        pid = pl.program_id(0)

        @pl.when(pid == 0)
        def _init():
            out_ref[0, 0] = jnp.float32(0.0)

        labels = lbl_ref[...]                                    # (TN, 1) int32
        c = y1_ref.shape[1]

        # Class one-hot mask: built ONCE per tile, shared by all three CEs.
        classes = jax.lax.broadcasted_iota(jnp.int32, (tn, c), 1)
        hit = classes == labels                                  # (TN, C) bool

        if needs_mask:
            rows = pid * tn + jax.lax.broadcasted_iota(jnp.int32, (tn, 1), 0)
            valid = rows < n_total                               # (TN, 1) bool
        else:
            valid = None

        def ce_tile_sum(ref):
            logits = ref[...].astype(jnp.float32)                # cast after load
            m = jnp.max(logits, axis=-1, keepdims=True)
            shifted = logits - m
            lse = jnp.log(jnp.sum(jnp.exp(shifted), axis=-1, keepdims=True)) + m
            true_logit = jnp.sum(jnp.where(hit, logits, 0.0),
                                 axis=-1, keepdims=True)
            per_example = lse - true_logit                       # (TN, 1)
            if valid is not None:
                per_example = jnp.where(valid, per_example, 0.0)
            return jnp.sum(per_example)                          # tile SUM

        tile = (0.3 * ce_tile_sum(y1_ref)
                + 0.3 * ce_tile_sum(y2_ref)
                + 0.4 * ce_tile_sum(y3_ref))
        out_ref[0, 0] = out_ref[0, 0] + tile

        @pl.when(pid == pl.num_programs(0) - 1)
        def _finalize():
            out_ref[0, 0] = out_ref[0, 0] * jnp.float32(inv_n)

    return kernel


def inception_loss(y_aux1, y_aux2, y_hat, y, *, block_n=512):
    """y_aux1/y_aux2/y_hat: (N, C) logits (f32 or bf16); y: (N,) int class ids."""
    n, c = y_hat.shape
    assert y_aux1.shape == (n, c) and y_aux2.shape == (n, c) and y.shape == (n,)

    labels = y.astype(jnp.int32).reshape(n, 1)

    tn = _round_up(min(block_n, _round_up(n, 8)), 8)
    num_tiles = -(-n // tn)
    needs_mask = (num_tiles * tn) != n

    logit_spec = pl.BlockSpec((tn, c), lambda i: (i, 0))
    label_spec = pl.BlockSpec((tn, 1), lambda i: (i, 0))

    itemsize = jnp.dtype(y_hat.dtype).itemsize
    # double-buffered logit + label tiles, plus headroom
    tile_bytes = 2 * (3 * tn * c * itemsize + tn * 4)
    vmem_limit = int(min(max(tile_bytes + (4 << 20), 16 << 20), 100 << 20))

    cost = pl.CostEstimate(
        flops=int(8 * 3 * n * c),           # max / sub / select / adds per elem
        transcendentals=int(3 * n * c),     # exp
        bytes_accessed=int(3 * n * c * itemsize + n * 4 + 4),
    )

    out = pl.pallas_call(
        _make_kernel(n, tn, needs_mask),
        grid=(num_tiles,),
        out_shape=jax.ShapeDtypeStruct((1, 1), jnp.float32),
        in_specs=[logit_spec, logit_spec, logit_spec, label_spec],
        out_specs=pl.BlockSpec(memory_space=pltpu.MemorySpace.SMEM),
        compiler_params=pltpu.CompilerParams(
            dimension_semantics=("arbitrary",),
            vmem_limit_bytes=vmem_limit,
        ),
        cost_estimate=cost,
    )(y_aux1, y_aux2, y_hat, labels)
    return out[0, 0]


if __name__ == "__main__":
    key = jax.random.PRNGKey(0)
    k1, k2, k3, k4 = jax.random.split(key, 4)

    N, C = 20, 32  # deliberately not a multiple of the tile to exercise masking
    y_aux1 = jax.random.normal(k1, (N, C), dtype=jnp.float32)
    y_aux2 = jax.random.normal(k2, (N, C), dtype=jnp.float32)
    y_hat = jax.random.normal(k3, (N, C), dtype=jnp.float32)
    y = jax.random.randint(k4, (N,), 0, C, dtype=jnp.int32)

    # reference (same math as F.cross_entropy with mean reduction)
    def ce_ref(logits, labels):
        logp = jax.nn.log_softmax(logits.astype(jnp.float32), axis=-1)
        return -jnp.mean(logp[jnp.arange(logits.shape[0]), labels])

    def ref_loss(a1, a2, h, labels):
        return (0.3 * ce_ref(a1, labels) + 0.3 * ce_ref(a2, labels)
                + 0.4 * ce_ref(h, labels))

    # multi-tile grid: TN=8 -> 3 grid steps, last tile padded & masked
    loss = inception_loss(y_aux1, y_aux2, y_hat, y, block_n=8)
    jax.block_until_ready(loss)
    ref = ref_loss(y_aux1, y_aux2, y_hat, y)
    assert jnp.allclose(loss, ref, atol=1e-5, rtol=1e-5), (loss, ref)

    # single-tile path + bf16 ingestion (no wrapper-side f32 cast)
    a1b = y_aux1.astype(jnp.bfloat16)
    a2b = y_aux2.astype(jnp.bfloat16)
    hb = y_hat.astype(jnp.bfloat16)
    loss_bf16 = inception_loss(a1b, a2b, hb, y)
    jax.block_until_ready(loss_bf16)
    ref_bf16 = ref_loss(a1b, a2b, hb, y)
    assert jnp.allclose(loss_bf16, ref_bf16, atol=1e-4, rtol=1e-4), (
        loss_bf16, ref_bf16)

    print("KERNEL_OK")
</pallas_src>

<mosaic_0001>
module attributes {stable_mosaic.version = 11 : i64} {
  func.func @kernel(%arg0: i32, %arg1: memref<8x32xf32, #tpu.memory_space<vmem>>, %arg2: memref<8x32xf32, #tpu.memory_space<vmem>>, %arg3: memref<8x32xf32, #tpu.memory_space<vmem>>, %arg4: memref<8x1xi32, #tpu.memory_space<vmem>>, %arg5: memref<1x1xf32, #tpu.memory_space<smem>>) attributes {dimension_semantics = [#tpu.dimension_semantics<arbitrary>], iteration_bounds = array<i64: 3>, scalar_prefetch = 0 : i64, scratch_operands = 0 : i64, tpu.core_type = #tpu.core_type<tc>, window_params = [{transform_indices = @transform_0, window_bounds = array<i64: 8, 32>}, {transform_indices = @transform_1, window_bounds = array<i64: 8, 32>}, {transform_indices = @transform_2, window_bounds = array<i64: 8, 32>}, {transform_indices = @transform_3, window_bounds = array<i64: 8, 1>}, {transform_indices = @transform_4, window_bounds = array<i64: 1, 1>}]} {
    %c0_i32 = arith.constant 0 : i32
    %0 = arith.cmpi eq, %arg0, %c0_i32 : i32
    %1 = arith.extui %0 : i1 to i32
    %c0_i32_0 = arith.constant 0 : i32
    %2 = arith.cmpi ne, %1, %c0_i32_0 : i32
    scf.if %2 {
      %cst_33 = arith.constant 0.000000e+00 : f32
      %c0_34 = arith.constant 0 : index
      %c0_35 = arith.constant 0 : index
      %87 = memref.load %arg5[%c0_34, %c0_35] : memref<1x1xf32, #tpu.memory_space<smem>>
      memref.store %cst_33, %arg5[%c0_34, %c0_35] : memref<1x1xf32, #tpu.memory_space<smem>>
    } else {
    }
    %c0 = arith.constant 0 : index
    %c0_1 = arith.constant 0 : index
    %3 = vector.load %arg4[%c0, %c0_1] : memref<8x1xi32, #tpu.memory_space<vmem>>, vector<8x1xi32>
    %4 = tpu.iota {dimensions = array<i32: 1>} : vector<8x32xi32>
    %5 = vector.broadcast %3 : vector<8x1xi32> to vector<8x32xi32>
    %6 = arith.cmpi eq, %4, %5 : vector<8x32xi32>
    %c8_i32 = arith.constant 8 : i32
    %7 = arith.muli %arg0, %c8_i32 : i32
    %8 = tpu.iota {dimensions = array<i32: 0>} : vector<8x1xi32>
    %9 = vector.broadcast %7 : i32 to vector<8x1xi32>
    %10 = arith.addi %9, %8 : vector<8x1xi32>
    %c20_i32 = arith.constant 20 : i32
    %11 = vector.broadcast %c20_i32 : i32 to vector<8x1xi32>
    %12 = arith.cmpi slt, %10, %11 : vector<8x1xi32>
    %c0_2 = arith.constant 0 : index
    %c0_3 = arith.constant 0 : index
    %13 = vector.load %arg1[%c0_2, %c0_3] : memref<8x32xf32, #tpu.memory_space<vmem>>, vector<8x32xf32>
    %cst = arith.constant dense<0xFF800000> : vector<8xf32>
    %14 = vector.multi_reduction <maximumf>, %13, %cst [1] : vector<8x32xf32> to vector<8xf32>
    %15 = vector.shape_cast %14 : vector<8xf32> to vector<8x1xf32>
    %16 = vector.broadcast %15 : vector<8x1xf32> to vector<8x32xf32>
    %17 = arith.subf %13, %16 : vector<8x32xf32>
    %18 = math.exp %17 : vector<8x32xf32>
    %cst_4 = arith.constant dense<0.000000e+00> : vector<8xf32>
    %19 = vector.multi_reduction <add>, %18, %cst_4 [1] : vector<8x32xf32> to vector<8xf32>
    %20 = vector.shape_cast %19 : vector<8xf32> to vector<8x1xf32>
    %21 = math.log %20 : vector<8x1xf32>
    %22 = arith.addf %21, %15 : vector<8x1xf32>
    %cst_5 = arith.constant 0.000000e+00 : f32
    %23 = vector.broadcast %cst_5 : f32 to vector<8x32xf32>
    %24 = arith.select %6, %13, %23 : vector<8x32xi1>, vector<8x32xf32>
    %cst_6 = arith.constant dense<0.000000e+00> : vector<8xf32>
    %25 = vector.multi_reduction <add>, %24, %cst_6 [1] : vector<8x32xf32> to vector<8xf32>
    %26 = vector.shape_cast %25 : vector<8xf32> to vector<8x1xf32>
    %27 = arith.subf %22, %26 : vector<8x1xf32>
    %cst_7 = arith.constant 0.000000e+00 : f32
    %28 = vector.broadcast %cst_7 : f32 to vector<8x1xf32>
    %29 = arith.select %12, %27, %28 : vector<8x1xi1>, vector<8x1xf32>
    %30 = vector.shape_cast %29 : vector<8x1xf32> to vector<1x8x1xf32>
    %cst_8 = arith.constant dense<0.000000e+00> : vector<1xf32>
    %31 = vector.multi_reduction <add>, %30, %cst_8 [1, 2] : vector<1x8x1xf32> to vector<1xf32>
    %32 = vector.shape_cast %31 : vector<1xf32> to vector<1x1x1xf32>
    %33 = vector.extract %32[0, 0, 0] : f32 from vector<1x1x1xf32>
    %cst_9 = arith.constant 3.000000e-01 : f32
    %34 = arith.mulf %cst_9, %33 : f32
    %c0_10 = arith.constant 0 : index
    %c0_11 = arith.constant 0 : index
    %35 = vector.load %arg2[%c0_10, %c0_11] : memref<8x32xf32, #tpu.memory_space<vmem>>, vector<8x32xf32>
    %cst_12 = arith.constant dense<0xFF800000> : vector<8xf32>
    %36 = vector.multi_reduction <maximumf>, %35, %cst_12 [1] : vector<8x32xf32> to vector<8xf32>
    %37 = vector.shape_cast %36 : vector<8xf32> to vector<8x1xf32>
    %38 = vector.broadcast %37 : vector<8x1xf32> to vector<8x32xf32>
    %39 = arith.subf %35, %38 : vector<8x32xf32>
    %40 = math.exp %39 : vector<8x32xf32>
    %cst_13 = arith.constant dense<0.000000e+00> : vector<8xf32>
    %41 = vector.multi_reduction <add>, %40, %cst_13 [1] : vector<8x32xf32> to vector<8xf32>
    %42 = vector.shape_cast %41 : vector<8xf32> to vector<8x1xf32>
    %43 = math.log %42 : vector<8x1xf32>
    %44 = arith.addf %43, %37 : vector<8x1xf32>
    %cst_14 = arith.constant 0.000000e+00 : f32
    %45 = vector.broadcast %cst_14 : f32 to vector<8x32xf32>
    %46 = arith.select %6, %35, %45 : vector<8x32xi1>, vector<8x32xf32>
    %cst_15 = arith.constant dense<0.000000e+00> : vector<8xf32>
    %47 = vector.multi_reduction <add>, %46, %cst_15 [1] : vector<8x32xf32> to vector<8xf32>
    %48 = vector.shape_cast %47 : vector<8xf32> to vector<8x1xf32>
    %49 = arith.subf %44, %48 : vector<8x1xf32>
    %cst_16 = arith.constant 0.000000e+00 : f32
    %50 = vector.broadcast %cst_16 : f32 to vector<8x1xf32>
    %51 = arith.select %12, %49, %50 : vector<8x1xi1>, vector<8x1xf32>
    %52 = vector.shape_cast %51 : vector<8x1xf32> to vector<1x8x1xf32>
    %cst_17 = arith.constant dense<0.000000e+00> : vector<1xf32>
    %53 = vector.multi_reduction <add>, %52, %cst_17 [1, 2] : vector<1x8x1xf32> to vector<1xf32>
    %54 = vector.shape_cast %53 : vector<1xf32> to vector<1x1x1xf32>
    %55 = vector.extract %54[0, 0, 0] : f32 from vector<1x1x1xf32>
    %cst_18 = arith.constant 3.000000e-01 : f32
    %56 = arith.mulf %cst_18, %55 : f32
    %57 = arith.addf %34, %56 : f32
    %c0_19 = arith.constant 0 : index
    %c0_20 = arith.constant 0 : index
    %58 = vector.load %arg3[%c0_19, %c0_20] : memref<8x32xf32, #tpu.memory_space<vmem>>, vector<8x32xf32>
    %cst_21 = arith.constant dense<0xFF800000> : vector<8xf32>
    %59 = vector.multi_reduction <maximumf>, %58, %cst_21 [1] : vector<8x32xf32> to vector<8xf32>
    %60 = vector.shape_cast %59 : vector<8xf32> to vector<8x1xf32>
    %61 = vector.broadcast %60 : vector<8x1xf32> to vector<8x32xf32>
    %62 = arith.subf %58, %61 : vector<8x32xf32>
    %63 = math.exp %62 : vector<8x32xf32>
    %cst_22 = arith.constant dense<0.000000e+00> : vector<8xf32>
    %64 = vector.multi_reduction <add>, %63, %cst_22 [1] : vector<8x32xf32> to vector<8xf32>
    %65 = vector.shape_cast %64 : vector<8xf32> to vector<8x1xf32>
    %66 = math.log %65 : vector<8x1xf32>
    %67 = arith.addf %66, %60 : vector<8x1xf32>
    %cst_23 = arith.constant 0.000000e+00 : f32
    %68 = vector.broadcast %cst_23 : f32 to vector<8x32xf32>
    %69 = arith.select %6, %58, %68 : vector<8x32xi1>, vector<8x32xf32>
    %cst_24 = arith.constant dense<0.000000e+00> : vector<8xf32>
    %70 = vector.multi_reduction <add>, %69, %cst_24 [1] : vector<8x32xf32> to vector<8xf32>
    %71 = vector.shape_cast %70 : vector<8xf32> to vector<8x1xf32>
    %72 = arith.subf %67, %71 : vector<8x1xf32>
    %cst_25 = arith.constant 0.000000e+00 : f32
    %73 = vector.broadcast %cst_25 : f32 to vector<8x1xf32>
    %74 = arith.select %12, %72, %73 : vector<8x1xi1>, vector<8x1xf32>
    %75 = vector.shape_cast %74 : vector<8x1xf32> to vector<1x8x1xf32>
    %cst_26 = arith.constant dense<0.000000e+00> : vector<1xf32>
    %76 = vector.multi_reduction <add>, %75, %cst_26 [1, 2] : vector<1x8x1xf32> to vector<1xf32>
    %77 = vector.shape_cast %76 : vector<1xf32> to vector<1x1x1xf32>
    %78 = vector.extract %77[0, 0, 0] : f32 from vector<1x1x1xf32>
    %cst_27 = arith.constant 4.000000e-01 : f32
    %79 = arith.mulf %cst_27, %78 : f32
    %80 = arith.addf %57, %79 : f32
    %c0_28 = arith.constant 0 : index
    %c0_29 = arith.constant 0 : index
    %81 = memref.load %arg5[%c0_28, %c0_29] : memref<1x1xf32, #tpu.memory_space<smem>>
    %82 = arith.addf %81, %80 : f32
    %c0_30 = arith.constant 0 : index
    %c0_31 = arith.constant 0 : index
    %83 = memref.load %arg5[%c0_30, %c0_31] : memref<1x1xf32, #tpu.memory_space<smem>>
    memref.store %82, %arg5[%c0_30, %c0_31] : memref<1x1xf32, #tpu.memory_space<smem>>
    %c2_i32 = arith.constant 2 : i32
    %84 = arith.cmpi eq, %arg0, %c2_i32 : i32
    %85 = arith.extui %84 : i1 to i32
    %c0_i32_32 = arith.constant 0 : i32
    %86 = arith.cmpi ne, %85, %c0_i32_32 : i32
    scf.if %86 {
      %c0_33 = arith.constant 0 : index
      %c0_34 = arith.constant 0 : index
      %87 = memref.load %arg5[%c0_33, %c0_34] : memref<1x1xf32, #tpu.memory_space<smem>>
      %cst_35 = arith.constant 5.000000e-02 : f32
      %88 = arith.mulf %87, %cst_35 : f32
      %c0_36 = arith.constant 0 : index
      %c0_37 = arith.constant 0 : index
      %89 = memref.load %arg5[%c0_36, %c0_37] : memref<1x1xf32, #tpu.memory_space<smem>>
      memref.store %88, %arg5[%c0_36, %c0_37] : memref<1x1xf32, #tpu.memory_space<smem>>
    } else {
    }
    return
  }
  func.func @transform_0(%arg0: i32) -> (i32, i32) {
    %c0_i32 = arith.constant 0 : i32
    %c0_i32_0 = arith.constant 0 : i32
    return %arg0, %c0_i32 : i32, i32
  }
  func.func @transform_1(%arg0: i32) -> (i32, i32) {
    %c0_i32 = arith.constant 0 : i32
    %c0_i32_0 = arith.constant 0 : i32
    return %arg0, %c0_i32 : i32, i32
  }
  func.func @transform_2(%arg0: i32) -> (i32, i32) {
    %c0_i32 = arith.constant 0 : i32
    %c0_i32_0 = arith.constant 0 : i32
    return %arg0, %c0_i32 : i32, i32
  }
  func.func @transform_3(%arg0: i32) -> (i32, i32) {
    %c0_i32 = arith.constant 0 : i32
    %c0_i32_0 = arith.constant 0 : i32
    return %arg0, %c0_i32 : i32, i32
  }
  func.func @transform_4(%arg0: i32) -> (i32, i32) {
    %c0_i32 = arith.constant 0 : i32
    %c0_i32_0 = arith.constant 0 : i32
    %c0_i32_1 = arith.constant 0 : i32
    return %c0_i32, %c0_i32_0 : i32, i32
  }
}

</mosaic_0001>

<llo_original>
// kernel: tpu_custom_call.1
$region0: #{tpu_custom_call.1}
  #allocation0 [shape = 'u32[]', space=smem, size = 0x4, offset = 0x4, fixed_abs, tag = 'smem constant byte address 0x4 - core index']
  #allocation1 [shape = 'u32[72,128]{1,0:T(1,128)}', space=vmem, size = 0x9000, scoped, tag = 'internal scratch']
  %s0 = inlined_call_operand.vmem [shape: f32[20,32], index: 0, kind: input, shape index: {}]
  %s1 = inlined_call_operand.hbm [shape: f32[20,32], index: 1, kind: input, shape index: {}]
  %s2 = inlined_call_operand.hbm [shape: f32[20,32], index: 2, kind: input, shape index: {}]
  %s3 = inlined_call_operand.vmem [shape: s32[20,1], index: 3, kind: input, shape index: {}]
  %s4 = inlined_call_operand.hbm [shape: f32[1,1], index: 4, kind: output, shape index: {}]
  %s5 = sld [smem:[#allocation0]]
  $region65: #{tpu_custom_call.1} parent=0
    _
  %s7 = ssub.s32 1, %s5
  %s8 = scalar_select 0, %s7, %s5
  $region1: #{tpu_custom_call.1} parent=0
    #allocation2 [shape = 'u8[8192]{0}', space=vmem, size = 0x2000, scoped, tag = 'input window, operand 1']
    #allocation3 [shape = 's32[2]{0}', space=sflag, size = 0x8, scoped, tag = 'scoped memory for tpu_custom_call.1']
    #allocation4 [shape = 's32[2]{0}', space=sflag, size = 0x8, scoped, tag = 'scoped memory for tpu_custom_call.1']
    #allocation5 [shape = 'u8[8192]{0}', space=vmem, size = 0x2000, scoped, tag = 'input window, operand 2']
    #allocation6 [shape = 's32[2]{0}', space=sflag, size = 0x8, scoped, tag = 'scoped memory for tpu_custom_call.1']
    #allocation7 [shape = 'u8[512]{0}', space=smem, size = 0x200, scoped, tag = 'output window, operand 0, single buffered']
    %9 = vsyncpa [#allocation3], 0
    %s10 = scalar_lea.sflag [#allocation3], 1
    %11 = vsyncpa %s10, 0
    %12 = vsyncpa [#allocation6], 0
    %s13 = scalar_lea.sflag [#allocation6], 1
    %14 = vsyncpa %s13, 0
    %15 = vsyncpa [#allocation4], 0
    loop: start=0, step=1, limit=5
    $region2: #{tpu_custom_call.1} parent=1 // loop_pre_header
      _
    $region3: #{tpu_custom_call.1} parent=1 // loop_header
      %s17 = sphi 0, %s21
      %p18 = scmp.ge.s32.totalorder %s17, 5
      %s27 = sphi 0, %s29
      %s30 = sphi 0, %s27
      %s31 = sphi 0, %s30
      %s47 = sphi 0, %s31
      %s53 = sphi 0, %s55
      %s56 = sphi 0, %s53
      %s57 = sphi 0, %s56
      %s73 = sphi 0, %s57
      %s79 = sphi 0, %s81
      %s82 = sphi 0, %s79
      %s83 = sphi 0, %s82
      %s99 = sphi 0, %s83
      %s105 = sphi 0, %s107
      %s108 = sphi 0, %s105
      %s109 = sphi 0, %s108
      %s125 = sphi 0, %s109
      %s129 = sphi 0, %s129
      %s131 = sphi 0, %s129
      %s132 = sphi 0, %s131
      %s146 = sphi 0, %s132
    $region4: #{tpu_custom_call.1} parent=1 // loop_header_branch
      %20 = sbr.rel (%p18) target = $region8
    $region5: #{tpu_custom_call.1} parent=1 // loop_body
      %s22 = ssub.s32 %s17, 1
      %s23 = ssub.s32 %s17, 2
      %s24 = sadd.s32 %s17, 1
      %s25 = ssub.s32 %s17, %s24
      %p26 = scmp.eq.s32.totalorder %s25, 0
      %s28 = sadd.s32 %s27, 1
      %s29 = scalar_select %p26, %s27, %s28
      %p32 = pneg %p26
      %p33 = scmp.eq.s32.totalorder %s17, 2
      %p34 = por %p32, %p33
      %p35 = scmp.ne.s32.totalorder %s27, %s30
      %p36 = scmp.eq.s32.totalorder %s17, 0
      %p37 = por %p35, %p36
      %p38 = scmp.ne.s32.totalorder %s27, %s30
      %p39 = scmp.eq.s32.totalorder %s22, 2
      %p40 = por %p38, %p39
      %p41 = scmp.ne.s32.totalorder %s30, %s31
      %p42 = scmp.eq.s32.totalorder %s22, 0
      %p43 = por %p41, %p42
      %p44 = scmp.ne.s32.totalorder %s30, %s31
      %p45 = scmp.eq.s32.totalorder %s23, 2
      %p46 = por %p44, %p45
      %p48 = scmp.ne.s32.totalorder %s31, %s47
      %p49 = scmp.eq.s32.totalorder %s23, 0
      %p50 = por %p48, %p49
      %s51 = ssub.s32 %s17, %s24
      %p52 = scmp.eq.s32.totalorder %s51, 0
      %s54 = sadd.s32 %s53, 1
      %s55 = scalar_select %p52, %s53, %s54
      %p58 = pneg %p52
      %p59 = scmp.eq.s32.totalorder %s17, 2
      %p60 = por %p58, %p59
      %p61 = scmp.ne.s32.totalorder %s53, %s56
      %p62 = scmp.eq.s32.totalorder %s17, 0
      %p63 = por %p61, %p62
      %p64 = scmp.ne.s32.totalorder %s53, %s56
      %p65 = scmp.eq.s32.totalorder %s22, 2
      %p66 = por %p64, %p65
      %p67 = scmp.ne.s32.totalorder %s56, %s57
      %p68 = scmp.eq.s32.totalorder %s22, 0
      %p69 = por %p67, %p68
      %p70 = scmp.ne.s32.totalorder %s56, %s57
      %p71 = scmp.eq.s32.totalorder %s23, 2
      %p72 = por %p70, %p71
      %p74 = scmp.ne.s32.totalorder %s57, %s73
      %p75 = scmp.eq.s32.totalorder %s23, 0
      %p76 = por %p74, %p75
      %s77 = ssub.s32 %s17, %s24
      %p78 = scmp.eq.s32.totalorder %s77, 0
      %s80 = sadd.s32 %s79, 1
      %s81 = scalar_select %p78, %s79, %s80
      %p84 = pneg %p78
      %p85 = scmp.eq.s32.totalorder %s17, 2
      %p86 = por %p84, %p85
      %p87 = scmp.ne.s32.totalorder %s79, %s82
      %p88 = scmp.eq.s32.totalorder %s17, 0
      %p89 = por %p87, %p88
      %p90 = scmp.ne.s32.totalorder %s79, %s82
      %p91 = scmp.eq.s32.totalorder %s22, 2
      %p92 = por %p90, %p91
      %p93 = scmp.ne.s32.totalorder %s82, %s83
      %p94 = scmp.eq.s32.totalorder %s22, 0
      %p95 = por %p93, %p94
      %p96 = scmp.ne.s32.totalorder %s82, %s83
      %p97 = scmp.eq.s32.totalorder %s23, 2
      %p98 = por %p96, %p97
      %p100 = scmp.ne.s32.totalorder %s83, %s99
      %p101 = scmp.eq.s32.totalorder %s23, 0
      %p102 = por %p100, %p101
      %s103 = ssub.s32 %s17, %s24
      %p104 = scmp.eq.s32.totalorder %s103, 0
      %s106 = sadd.s32 %s105, 1
      %s107 = scalar_select %p104, %s105, %s106
      %p110 = pneg %p104
      %p111 = scmp.eq.s32.totalorder %s17, 2
      %p112 = por %p110, %p111
      %p113 = scmp.ne.s32.totalorder %s105, %s108
      %p114 = scmp.eq.s32.totalorder %s17, 0
      %p115 = por %p113, %p114
      %p116 = scmp.ne.s32.totalorder %s105, %s108
      %p117 = scmp.eq.s32.totalorder %s22, 2
      %p118 = por %p116, %p117
      %p119 = scmp.ne.s32.totalorder %s108, %s109
      %p120 = scmp.eq.s32.totalorder %s22, 0
      %p121 = por %p119, %p120
      %p122 = scmp.ne.s32.totalorder %s108, %s109
      %p123 = scmp.eq.s32.totalorder %s23, 2
      %p124 = por %p122, %p123
      %p126 = scmp.ne.s32.totalorder %s109, %s125
      %p127 = scmp.eq.s32.totalorder %s23, 0
      %p128 = por %p126, %p127
      %s130 = sadd.s32 %s129, 1
      %p133 = scmp.eq.s32.totalorder %s17, 2
      %p134 = scmp.ne.s32.totalorder %s129, %s131
      %p135 = scmp.eq.s32.totalorder %s17, 0
      %p136 = por %p134, %p135
      %p137 = scmp.ne.s32.totalorder %s129, %s131
      %p138 = scmp.eq.s32.totalorder %s22, 2
      %p139 = por %p137, %p138
      %p140 = scmp.ne.s32.totalorder %s131, %s132
      %p141 = scmp.eq.s32.totalorder %s22, 0
      %p142 = por %p140, %p141
      %p143 = scmp.ne.s32.totalorder %s131, %s132
      %p144 = scmp.eq.s32.totalorder %s23, 2
      %p145 = por %p143, %p144
      %p147 = scmp.ne.s32.totalorder %s132, %s146
      %p148 = scmp.eq.s32.totalorder %s23, 0
      %p149 = por %p147, %p148
      %p150 = scmp.le.s32.totalorder 1, %s17
      %p151 = scmp.lt.s32.totalorder %s17, 4
      %p152 = pnand %p150, %p151
      %p153 = pneg %p152
      // Predicated region
      $region9: #{tpu_custom_call.1} parent=5 // pred_check
        _
      $region10: #{tpu_custom_call.1} parent=5 // pred_check_branch
        %155 = sbr.rel (%p152) target = $region12
      $region11: #{tpu_custom_call.1} parent=5 // pred_region
        %s156 = ssub.s32 %s17, 1
      $region12: #{tpu_custom_call.1} parent=5 // pred_fallthru
        _
      %p157 = scmp.lt.s32.totalorder %s17, 3
      // Predicated region
      $region13: #{tpu_custom_call.1} parent=5 // pred_check
        %p158 = pneg %p157
      $region14: #{tpu_custom_call.1} parent=5 // pred_check_branch
        %160 = sbr.rel (%p158) target = $region16
      $region15: #{tpu_custom_call.1} parent=5 // pred_region
        // Predicated region
        $region17: #{tpu_custom_call.1} parent=15 // pred_check
          %p161 = pneg %p37
        $region18: #{tpu_custom_call.1} parent=15 // pred_check_branch
          %163 = sbr.rel (%p161) target = $region20
        $region19: #{tpu_custom_call.1} parent=15 // pred_region
          %p164 = scmp.lt.s32.totalorder %s17, 2
          %s165 = scalar_select %p164, %s17, 2
          %s166 = smul.addr %s165, 8
          %s167 = scalar_lea.vmem %s0, %s166
        $region20: #{tpu_custom_call.1} parent=15 // pred_fallthru
          _
        // Predicated region
        $region21: #{tpu_custom_call.1} parent=15 // pred_check
          %p168 = pneg %p63
        $region22: #{tpu_custom_call.1} parent=15 // pred_check_branch
          %170 = sbr.rel (%p168) target = $region24
        $region23: #{tpu_custom_call.1} parent=15 // pred_region
          %s171 = sand.u32 %s53, 1
          %s172 = scalar_lea.sflag [#allocation3], %s171
          %s173 = sand.u32 %s53, 1
          %s174 = smul.addr %s173, 8
          %s175 = scalar_lea.vmem [#allocation2], %s174
          %177 = vsyncadd %s172, 0
          %s178 = smul.addr %s17, 8
          %s179 = scalar_lea.hbm %s1, %s178
          %s181 = sshll.u32 %s179, 4
          %s182 = int_to_ptr.hbm [resolvable:$true] %s181
          %s183 = sshll.u32 %s175, 4
          %s184 = int_to_ptr.vmem [resolvable:$true] %s183
          %186 = dma.hbm_to_vmem [thread:$0]  %s182, 128, %s184, %s172
        $region24: #{tpu_custom_call.1} parent=15 // pred_fallthru
          _
        // Predicated region
        $region25: #{tpu_custom_call.1} parent=15 // pred_check
          %p187 = pneg %p89
        $region26: #{tpu_custom_call.1} parent=15 // pred_check_branch
          %189 = sbr.rel (%p187) target = $region28
        $region27: #{tpu_custom_call.1} parent=15 // pred_region
          %s190 = sand.u32 %s79, 1
          %s191 = scalar_lea.sflag [#allocation6], %s190
          %s192 = sand.u32 %s79, 1
          %s193 = smul.addr %s192, 8
          %s194 = scalar_lea.vmem [#allocation5], %s193
          %196 = vsyncadd %s191, 0
          %s197 = smul.addr %s17, 8
          %s198 = scalar_lea.hbm %s2, %s197
          %s200 = sshll.u32 %s198, 4
          %s201 = int_to_ptr.hbm [resolvable:$true] %s200
          %s202 = sshll.u32 %s194, 4
          %s203 = int_to_ptr.vmem [resolvable:$true] %s202
          %205 = dma.hbm_to_vmem [thread:$0]  %s201, 128, %s203, %s191
        $region28: #{tpu_custom_call.1} parent=15 // pred_fallthru
          _
        // Predicated region
        $region29: #{tpu_custom_call.1} parent=15 // pred_check
          %p206 = pneg %p115
        $region30: #{tpu_custom_call.1} parent=15 // pred_check_branch
          %208 = sbr.rel (%p206) target = $region32
        $region31: #{tpu_custom_call.1} parent=15 // pred_region
          %p209 = scmp.lt.s32.totalorder %s17, 2
          %s210 = scalar_select %p209, %s17, 2
          %s211 = smul.addr %s210, 8
          %s212 = scalar_lea.vmem %s3, %s211
        $region32: #{tpu_custom_call.1} parent=15 // pred_fallthru
          _
      $region16: #{tpu_custom_call.1} parent=5 // pred_fallthru
        _
      %p213 = scmp.le.s32.totalorder 1, %s17
      %p214 = scmp.lt.s32.totalorder %s17, 4
      %p215 = pnand %p213, %p214
      %p216 = pneg %p215
      // Predicated region
      $region33: #{tpu_custom_call.1} parent=5 // pred_check
        _
      $region34: #{tpu_custom_call.1} parent=5 // pred_check_branch
        %218 = sbr.rel (%p215) target = $region36
      $region35: #{tpu_custom_call.1} parent=5 // pred_region
        %s219 = ssub.s32 %s17, 1
        %s220 = sand.u32 %s56, 1
        %s221 = scalar_lea.sflag [#allocation3], %s220
        %s222 = sand.u32 %s56, 1
        %s223 = smul.addr %s222, 8
        %s224 = scalar_lea.vmem [#allocation2], %s223
        // Predicated region
        $region37: #{tpu_custom_call.1} parent=35 // pred_check
          %p225 = pneg %p69
        $region38: #{tpu_custom_call.1} parent=35 // pred_check_branch
          %227 = sbr.rel (%p225) target = $region40
        $region39: #{tpu_custom_call.1} parent=35 // pred_region
          %229 = dma.done %s221, 128
        $region40: #{tpu_custom_call.1} parent=35 // pred_fallthru
          _
        %s230 = sand.u32 %s82, 1
        %s231 = scalar_lea.sflag [#allocation6], %s230
        %s232 = sand.u32 %s82, 1
        %s233 = smul.addr %s232, 8
        %s234 = scalar_lea.vmem [#allocation5], %s233
        // Predicated region
        $region41: #{tpu_custom_call.1} parent=35 // pred_check
          %p235 = pneg %p95
        $region42: #{tpu_custom_call.1} parent=35 // pred_check_branch
          %237 = sbr.rel (%p235) target = $region44
        $region43: #{tpu_custom_call.1} parent=35 // pred_region
          %239 = dma.done %s231, 128
        $region44: #{tpu_custom_call.1} parent=35 // pred_fallthru
          _
        %p240 = scmp.lt.s32.totalorder %s22, 2
        %s241 = scalar_select %p240, %s22, 2
        %s242 = smul.addr %s241, 8
        %s243 = scalar_lea.vmem %s0, %s242
        %p244 = pneg %p43
        %p245 = pneg %p40
        %s246 = sand.u32 %s56, 1
        %s247 = scalar_lea.sflag [#allocation3], %s246
        %s248 = sand.u32 %s56, 1
        %s249 = smul.addr %s248, 8
        %s250 = scalar_lea.vmem [#allocation2], %s249
        %p251 = pneg %p69
        %p252 = pneg %p66
        %s253 = sand.u32 %s82, 1
        %s254 = scalar_lea.sflag [#allocation6], %s253
        %s255 = sand.u32 %s82, 1
        %s256 = smul.addr %s255, 8
        %s257 = scalar_lea.vmem [#allocation5], %s256
        %p258 = pneg %p95
        %p259 = pneg %p92
        %p260 = scmp.lt.s32.totalorder %s22, 2
        %s261 = scalar_select %p260, %s22, 2
        %s262 = smul.addr %s261, 8
        %s263 = scalar_lea.vmem %s3, %s262
        %p264 = pneg %p121
        %p265 = pneg %p118
        %p266 = pneg %p142
        %p267 = pneg %p139
        %p268 = scmp.lt.s32.totalorder %s22, 2
        %s269 = scalar_select %p268, %s22, 2
        %s270 = smul.addr %s269, 8
        %s271 = scalar_lea.vmem %s0, %s270
        %p272 = scmp.lt.s32.totalorder %s22, 2
        %s273 = scalar_select %p272, %s22, 2
        %s274 = smul.addr %s273, 8
        %s275 = scalar_lea.vmem %s3, %s274
        %p276 = scmp.eq.s32.totalorder %s22, 0
        // Predicated region
        $region45: #{tpu_custom_call.1} parent=35 // pred_check
          %p277 = pneg %p276
        $region46: #{tpu_custom_call.1} parent=35 // pred_check_branch
          %279 = sbr.rel (%p277) target = $region48
        $region47: #{tpu_custom_call.1} parent=35 // pred_region
          %s280 = scalar_lea.smem [#allocation7], 0
          %281 = sst [smem:[%s280]] 0.0
        $region48: #{tpu_custom_call.1} parent=35 // pred_fallthru
          _
        %v282 = vld [vmem:[%s275] sm:$0xff]
        %v283 = vlaneseq
        %v284 = vand.u32 %v283, 127
        %285 = vset.pattern.permute.xlu0 0
        %286 = vperm.xlu0 %285, %v282
        %v287 = vpop.permute.xlu0 %286
        %vm288 = vcmp.eq.s32.totalorder %v284, %v287
        %s289 = smul.u32 %s22, 8
        %v290 = vlaneseq
        %v291 = vshrl.u32 %v290, 7
        %v292 = vstv %s289
        %v293 = vadd.s32 %v292, %v291
        %vm294 = vcmp.lt.s32.totalorder %v293, 20
        %v295 = vld [vmem:[%s271] sm:$0xff]
        %vm296 = vcmask 261120
        %v297 = vsel %vm296, %v295, -inf
        %298 = vmax.xlane.f32.xlu0 %v297
        %v299 = vpop.xlane.xlu0 %298
        %v300 = vsub.f32 %v295, %v299
        %v301 = vmul.f32 %v300, 1.442695
        %v302 = vpow.pop %v301
        %v303 = vsel %vm296, %v302, 0.0
        %304 = vadd.xlane.f32.xlu0 %v303
        %v305 = vpop.xlane.xlu0 %304
        %v306 = vlog2.pop %v305
        %v307 = vmul.f32 %v306, 0.6931472
        %v308 = vadd.f32 %v307, %v299
        %v309 = vsel %vm288, %v295, 0.0
        %v310 = vsel %vm296, %v309, 0.0
        %311 = vadd.xlane.f32.xlu0 %v310
        %v312 = vpop.xlane.xlu0 %311
        %v313 = vsub.f32 %v308, %v312
        %v314 = vsel %vm294, %v313, 0.0
        %vm315 = vcmask 7168
        %v316 = vsel %vm315, %v314, 0.0
        %317 = vadd.xlane.f32.xlu0 %v316
        %v318 = vpop.xlane.xlu0 %317
        %v319 = vrot.slane %v318, 4
        %v320 = vadd.f32 %v318, %v319
        %v321 = vrot.slane %v320, 2
        %v322 = vadd.f32 %v320, %v321
        %v323 = vrot.slane %v322, 1
        %v324 = vadd.f32 %v322, %v323
        %s325 = vtos %v324
        %s326 = smul.f32 %s325, 0.3
        %v327 = vld [vmem:[%s224] sm:$0xff]
        %v328 = vsel %vm296, %v327, -inf
        %329 = vmax.xlane.f32.xlu0 %v328
        %v330 = vpop.xlane.xlu0 %329
        %v331 = vsub.f32 %v327, %v330
        %v332 = vmul.f32 %v331, 1.442695
        %v333 = vpow.pop %v332
        %v334 = vsel %vm296, %v333, 0.0
        %335 = vadd.xlane.f32.xlu0 %v334
        %v336 = vpop.xlane.xlu0 %335
        %v337 = vlog2.pop %v336
        %v338 = vmul.f32 %v337, 0.6931472
        %v339 = vadd.f32 %v338, %v330
        %v340 = vsel %vm288, %v327, 0.0
        %v341 = vsel %vm296, %v340, 0.0
        %342 = vadd.xlane.f32.xlu0 %v341
        %v343 = vpop.xlane.xlu0 %342
        %v344 = vsub.f32 %v339, %v343
        %v345 = vsel %vm294, %v344, 0.0
        %v346 = vsel %vm315, %v345, 0.0
        %347 = vadd.xlane.f32.xlu0 %v346
        %v348 = vpop.xlane.xlu0 %347
        %v349 = vrot.slane %v348, 4
        %v350 = vadd.f32 %v348, %v349
        %v351 = vrot.slane %v350, 2
        %v352 = vadd.f32 %v350, %v351
        %v353 = vrot.slane %v352, 1
        %v354 = vadd.f32 %v352, %v353
        %s355 = vtos %v354
        %s356 = smul.f32 %s355, 0.3
        %s357 = sadd.f32 %s326, %s356
        %v358 = vld [vmem:[%s234] sm:$0xff]
        %v359 = vsel %vm296, %v358, -inf
        %360 = vmax.xlane.f32.xlu0 %v359
        %v361 = vpop.xlane.xlu0 %360
        %v362 = vsub.f32 %v358, %v361
        %v363 = vmul.f32 %v362, 1.442695
        %v364 = vpow.pop %v363
        %v365 = vsel %vm296, %v364, 0.0
        %366 = vadd.xlane.f32.xlu0 %v365
        %v367 = vpop.xlane.xlu0 %366
        %v368 = vlog2.pop %v367
        %v369 = vmul.f32 %v368, 0.6931472
        %v370 = vadd.f32 %v369, %v361
        %v371 = vsel %vm288, %v358, 0.0
        %v372 = vsel %vm296, %v371, 0.0
        %373 = vadd.xlane.f32.xlu0 %v372
        %v374 = vpop.xlane.xlu0 %373
        %v375 = vsub.f32 %v370, %v374
        %v376 = vsel %vm294, %v375, 0.0
        %v377 = vsel %vm315, %v376, 0.0
        %378 = vadd.xlane.f32.xlu0 %v377
        %v379 = vpop.xlane.xlu0 %378
        %v380 = vrot.slane %v379, 4
        %v381 = vadd.f32 %v379, %v380
        %v382 = vrot.slane %v381, 2
        %v383 = vadd.f32 %v381, %v382
        %v384 = vrot.slane %v383, 1
        %v385 = vadd.f32 %v383, %v384
        %s386 = vtos %v385
        %s387 = smul.f32 %s386, 0.4
        %s388 = sadd.f32 %s357, %s387
        %s389 = sld [smem:[#allocation7]]
        %s390 = sadd.f32 %s389, %s388
        %s391 = scalar_lea.smem [#allocation7], 0
        %392 = sst [smem:[%s391]] %s390
        %p393 = scmp.eq.s32.totalorder %s22, 2
        // Predicated region
        $region49: #{tpu_custom_call.1} parent=35 // pred_check
          %p394 = pneg %p393
        $region50: #{tpu_custom_call.1} parent=35 // pred_check_branch
          %396 = sbr.rel (%p394) target = $region52
        $region51: #{tpu_custom_call.1} parent=35 // pred_region
          %s397 = sld [smem:[#allocation7]]
          %s398 = smul.f32 %s397, 0.05
          %399 = sst [smem:[%s391]] %s398
        $region52: #{tpu_custom_call.1} parent=35 // pred_fallthru
          _
        // Predicated region
        $region53: #{tpu_custom_call.1} parent=35 // pred_check
          %p400 = pneg %p139
        $region54: #{tpu_custom_call.1} parent=35 // pred_check_branch
          %402 = sbr.rel (%p400) target = $region56
        $region55: #{tpu_custom_call.1} parent=35 // pred_region
          %404 = vsyncadd [#allocation4], 0
          %s406 = sshll.u32 %s4, 4
          %s407 = int_to_ptr.hbm [resolvable:$true] %s406
          %409 = dma.smem_to_hbm [#allocation7], 16, %s407, [#allocation4]
        $region56: #{tpu_custom_call.1} parent=35 // pred_fallthru
          _
        // Predicated region
        $region57: #{tpu_custom_call.1} parent=35 // pred_check
          %p410 = pneg %p139
        $region58: #{tpu_custom_call.1} parent=35 // pred_check_branch
          %412 = sbr.rel (%p410) target = $region60
        $region59: #{tpu_custom_call.1} parent=35 // pred_region
          %414 = dma.done [#allocation4], 16
        $region60: #{tpu_custom_call.1} parent=35 // pred_fallthru
          _
        %415 = sfence
      $region36: #{tpu_custom_call.1} parent=5 // pred_fallthru
        _
      %p416 = scmp.le.s32.totalorder 2, %s17
      // Predicated region
      $region61: #{tpu_custom_call.1} parent=5 // pred_check
        %p417 = pneg %p416
      $region62: #{tpu_custom_call.1} parent=5 // pred_check_branch
        %419 = sbr.rel (%p417) target = $region64
      $region63: #{tpu_custom_call.1} parent=5 // pred_region
        %s420 = ssub.s32 %s17, 2
      $region64: #{tpu_custom_call.1} parent=5 // pred_fallthru
        _
    $region6: #{tpu_custom_call.1} parent=1 // loop_footer
      %s21 = sadd.s32 1, %s17
    $region7: #{tpu_custom_call.1} parent=1 // loop_footer_branch
      %16 = sbr.rel target = $region3
    $region8: #{tpu_custom_call.1} parent=1 // loop_exit
      _
    %421 = vsyncpa [#allocation3], 1
    %s422 = scalar_lea.sflag [#allocation3], 1
    %423 = vsyncpa %s422, 1
    %424 = vsyncpa [#allocation6], 1
    %s425 = scalar_lea.sflag [#allocation6], 1
    %426 = vsyncpa %s425, 1
    %427 = vsyncpa [#allocation4], 1
    %s428 = scalar_lea.sflag [#allocation4], 1
    %429 = vsyncpa %s428, 1

</llo_original>
